<compile_context>
chip_gen: v7x
topology: tpu7x:2x2x1
jax: 0.10.0
libtpu: 0.0.40
codegen_flags: <defaults>
</compile_context>

<pallas_src>
import jax
import jax.numpy as jnp
from jax.experimental import pallas as pl
from jax.experimental.pallas import tpu as pltpu


# ---------------------------------------------------------------------------
# Kernels
# ---------------------------------------------------------------------------

def fusion_kernel_single(x_ref, b_ref, w_ref, o_ref):
    """Single K-step path: no accumulator scratch, one pass per output tile."""
    acc = jnp.dot(x_ref[...], w_ref[...], preferred_element_type=jnp.float32)
    acc = acc + b_ref[...].astype(jnp.float32)
    o_ref[...] = jnp.tanh(acc).astype(o_ref.dtype)


def fusion_kernel_tiled(x_ref, b_ref, w_ref, o_ref, acc_ref):
    """Multi K-step path: f32 accumulator resident across the (innermost) K axis.

    The per-row bias initializes the accumulator at k==0 (instead of zeros), so the
    finalize step is just tanh + cast + store.
    """
    k = pl.program_id(2)

    @pl.when(k == 0)
    def _init():
        acc_ref[...] = b_ref[...].astype(jnp.float32)

    acc_ref[...] += jnp.dot(x_ref[...], w_ref[...],
                            preferred_element_type=jnp.float32)

    @pl.when(k == pl.num_programs(2) - 1)
    def _finalize():
        o_ref[...] = jnp.tanh(acc_ref[...]).astype(o_ref.dtype)


# ---------------------------------------------------------------------------
# Wrapper-side helpers
# ---------------------------------------------------------------------------

def _round_up(x, m):
    return ((x + m - 1) // m) * m


def _vmem_limit_bytes():
    """Per-generation VMEM budget (~75% of physical, capped)."""
    cap = None
    try:
        cap = getattr(pltpu.get_tpu_info(), "vmem_capacity_bytes", None)
    except Exception:
        cap = None
    if not cap:
        cap = 64 * 1024 * 1024  # conservative: v7x physical VMEM
    return int(min(cap * 3 // 4, 112 * 1024 * 1024))


def prepare_fusion_params(weight, bias, input_dim, *, stream_dtype=jnp.bfloat16):
    """One-time parameter prep (hoisted out of the per-forward hot path).

    weight: (out_dim, input_dim + 2*attr_dim)  -- PyTorch nn.Linear (out, in) layout.
    Splits W = [Wx | Wa], transposes, zero-pads Wx to (K_pad, N_pad) multiples of 128
    (lane-dense) and casts it to the streaming dtype.
    """
    out_dim = weight.shape[0]
    sd = stream_dtype if stream_dtype is not None else weight.dtype
    k_pad = _round_up(input_dim, 128)
    n_pad = _round_up(out_dim, 128)

    wx = jnp.transpose(weight[:, :input_dim]).astype(jnp.float32)       # (in_dim, out_dim)
    wx = jnp.pad(wx, ((0, k_pad - input_dim), (0, n_pad - out_dim))).astype(sd)
    wa = jnp.transpose(weight[:, input_dim:]).astype(jnp.float32)       # (2*attr_dim, out_dim)

    return dict(wx=wx, wa=wa, bias=bias.astype(jnp.float32),
                in_dim=input_dim, out_dim=out_dim,
                k_pad=k_pad, n_pad=n_pad, stream_dtype=sd)


def fusion_forward(input_1, attrs, params):
    """input_1: (bs, seq, input_dim); attrs: sequence of (bs, attr_dim) arrays."""
    bs, seq, in_dim = input_1.shape
    assert in_dim == params["in_dim"]
    out_dim = params["out_dim"]
    k_pad, n_pad = params["k_pad"], params["n_pad"]
    sd = params["stream_dtype"]
    out_dtype = input_1.dtype

    stream_bytes = jnp.dtype(sd).itemsize
    out_bytes = jnp.dtype(out_dtype).itemsize
    sublane = 16 if stream_bytes < 4 else 8

    # --- fold attribute matmuls + bias into a per-batch bias (f32, exact) ----------
    a_cat = jnp.concatenate(list(attrs), axis=-1).astype(jnp.float32)    # (bs, 2*attr_dim)
    attr_bias = a_cat @ params["wa"] + params["bias"][None, :]           # (bs, out_dim)
    attr_bias = jnp.pad(attr_bias, ((0, 0), (0, n_pad - out_dim)))       # (bs, n_pad)

    # --- tile selection -------------------------------------------------------------
    # K / N: weight resident in VMEM when small (the common case), otherwise 512/256/128
    # tiles (K_pad/N_pad are multiples of 128, so 128 always divides -> never a
    # full-dim fallback that could blow VMEM).
    w_bytes = k_pad * n_pad * stream_bytes
    if w_bytes <= 8 * 1024 * 1024:
        tk, tn = k_pad, n_pad
    else:
        tk = 512 if k_pad % 512 == 0 else (256 if k_pad % 256 == 0 else 128)
        tn = 512 if n_pad % 512 == 0 else (256 if n_pad % 256 == 0 else 128)
    kt = k_pad // tk

    # M: flat bs*seq axis, decoupled from batch boundaries; big tiles (<=1024,
    # 256-aligned) but >=2 blocks once the problem is non-trivial (v7x megacore).
    m = bs * seq
    m_al = _round_up(m, sublane)
    if m_al <= 512:
        tm = m_al
    else:
        tm = min(1024, max(256, (_round_up(m_al, 256) // 2 // 256) * 256))

    # Keep (double-buffered tiles + optional accumulator) well inside the VMEM budget.
    vmem_limit = _vmem_limit_bytes()

    def _footprint(tm_):
        buf = 2 * (tm_ * tk + tm_ * tn + tk * tn) * stream_bytes
        buf += 2 * tm_ * tn * out_bytes
        if kt > 1:
            buf += tm_ * tn * 4
        return buf

    while tm > sublane and _footprint(tm) > int(vmem_limit * 0.85):
        tm = max(sublane, _round_up(tm // 2, sublane))

    m_pad = _round_up(m, tm)
    grid_m = m_pad // tm
    grid_n = n_pad // tn

    # --- prepare padded, lane-dense operand slabs ------------------------------------
    x2 = input_1.reshape(m, in_dim)
    x2 = jnp.pad(x2, ((0, m_pad - m), (0, k_pad - in_dim))).astype(sd)

    # Per-row bias (pre-expanded over seq) -> flat (tm, tn) add in the kernel, no
    # in-kernel reshape / sublane relayout, and M tiling is independent of seq.
    bias_rows = jnp.broadcast_to(attr_bias[:, None, :], (bs, seq, n_pad)).reshape(m, n_pad)
    bias_rows = jnp.pad(bias_rows, ((0, m_pad - m), (0, 0))).astype(sd)

    wxp = params["wx"]  # (k_pad, n_pad), already padded + cast in prepare_fusion_params

    # --- pallas_call ------------------------------------------------------------------
    if kt == 1:
        kernel = fusion_kernel_single
        grid = (grid_m, grid_n)
        in_specs = [
            pl.BlockSpec((tm, tk), lambda i, j: (i, 0)),   # x rows
            pl.BlockSpec((tm, tn), lambda i, j: (i, j)),   # per-row fused bias
            pl.BlockSpec((tk, tn), lambda i, j: (0, j)),   # Wx^T tile (VMEM-resident)
        ]
        out_specs = pl.BlockSpec((tm, tn), lambda i, j: (i, j))
        scratch_shapes = []
        dims = ("parallel", "parallel")
    else:
        kernel = fusion_kernel_tiled
        grid = (grid_m, grid_n, kt)
        in_specs = [
            pl.BlockSpec((tm, tk), lambda i, j, k: (i, k)),
            pl.BlockSpec((tm, tn), lambda i, j, k: (i, j)),
            pl.BlockSpec((tk, tn), lambda i, j, k: (k, j)),
        ]
        out_specs = pl.BlockSpec((tm, tn), lambda i, j, k: (i, j))
        scratch_shapes = [pltpu.VMEM((tm, tn), jnp.float32)]
        dims = ("parallel", "parallel", "arbitrary")

    out_pad = pl.pallas_call(
        kernel,
        out_shape=jax.ShapeDtypeStruct((m_pad, n_pad), out_dtype),
        grid=grid,
        in_specs=in_specs,
        out_specs=out_specs,
        scratch_shapes=scratch_shapes,
        compiler_params=pltpu.CompilerParams(
            dimension_semantics=dims,
            vmem_limit_bytes=vmem_limit,
        ),
    )(x2, bias_rows, wxp)

    return out_pad[:m, :out_dim].reshape(bs, seq, out_dim)


# ---------------------------------------------------------------------------
# Pure-JAX reference (mirrors the PyTorch module exactly)
# ---------------------------------------------------------------------------

def fusion_reference(input_1, attrs, weight, bias):
    bs, seq, _ = input_1.shape
    expanded = [jnp.broadcast_to(a[:, None, :], (bs, seq, a.shape[-1])) for a in attrs]
    cat = jnp.concatenate([input_1] + expanded, axis=-1)
    return jnp.tanh(jnp.einsum("bsd,od->bso", cat, weight) + bias)


if __name__ == "__main__":
    bs, seq, input_dim, attr_dim = 2, 8, 32, 8

    key = jax.random.PRNGKey(0)
    k_x, k_a1, k_a2, k_w, k_b = jax.random.split(key, 5)

    input_1 = jax.random.normal(k_x, (bs, seq, input_dim), dtype=jnp.float32)
    attr1 = jax.random.normal(k_a1, (bs, attr_dim), dtype=jnp.float32)
    attr2 = jax.random.normal(k_a2, (bs, attr_dim), dtype=jnp.float32)

    # Deterministic "nn.Linear(input_dim + 2*attr_dim, input_dim)" parameters.
    in_features = input_dim + 2 * attr_dim
    bound = 1.0 / (in_features ** 0.5)
    weight = jax.random.uniform(k_w, (input_dim, in_features), minval=-bound,
                                maxval=bound, dtype=jnp.float32)
    bias = jax.random.uniform(k_b, (input_dim,), minval=-bound, maxval=bound,
                              dtype=jnp.float32)

    ref = fusion_reference(input_1, (attr1, attr2), weight, bias)

    # f32 streaming path: bit-accurate vs the reference.
    params_f32 = prepare_fusion_params(weight, bias, input_dim, stream_dtype=jnp.float32)
    out_f32 = jax.block_until_ready(fusion_forward(input_1, (attr1, attr2), params_f32))
    assert out_f32.shape == (bs, seq, input_dim)
    assert jnp.allclose(out_f32, ref, atol=1e-5, rtol=1e-5), "f32 path mismatch"

    # bf16 streaming path (default fast path): f32 accumulation, looser tolerance.
    params_bf16 = prepare_fusion_params(weight, bias, input_dim)  # stream_dtype=bf16
    out_bf16 = jax.block_until_ready(fusion_forward(input_1, (attr1, attr2), params_bf16))
    assert out_bf16.shape == (bs, seq, input_dim)
    assert jnp.allclose(out_bf16, ref, atol=2e-2, rtol=2e-2), "bf16 path mismatch"

    print("KERNEL_OK")
</pallas_src>

<mosaic_0001>
module attributes {stable_mosaic.version = 11 : i64} {
  func.func @fusion_kernel_single(%arg0: i32, %arg1: i32, %arg2: memref<16x128xf32, #tpu.memory_space<vmem>>, %arg3: memref<16x128xf32, #tpu.memory_space<vmem>>, %arg4: memref<128x128xf32, #tpu.memory_space<vmem>>, %arg5: memref<16x128xf32, #tpu.memory_space<vmem>>) attributes {dimension_semantics = [#tpu.dimension_semantics<parallel>, #tpu.dimension_semantics<parallel>], iteration_bounds = array<i64: 1, 1>, scalar_prefetch = 0 : i64, scratch_operands = 0 : i64, tpu.core_type = #tpu.core_type<tc>, window_params = [{transform_indices = @transform_0, window_bounds = array<i64: 16, 128>}, {transform_indices = @transform_1, window_bounds = array<i64: 16, 128>}, {transform_indices = @transform_2, window_bounds = array<i64: 128, 128>}, {transform_indices = @transform_3, window_bounds = array<i64: 16, 128>}]} {
    %c0 = arith.constant 0 : index
    %c0_0 = arith.constant 0 : index
    %0 = vector.load %arg2[%c0, %c0_0] : memref<16x128xf32, #tpu.memory_space<vmem>>, vector<16x128xf32>
    %c0_1 = arith.constant 0 : index
    %c0_2 = arith.constant 0 : index
    %1 = vector.load %arg4[%c0_1, %c0_2] : memref<128x128xf32, #tpu.memory_space<vmem>>, vector<128x128xf32>
    %cst = arith.constant dense<0.000000e+00> : vector<16x128xf32>
    %2 = tpu.matmul %0, %1, %cst {dimension_numbers = #tpu.dot_dimension_numbers<[1], [0], [0], [1], [0, 0, 1, 1], [], []>} : vector<16x128xf32>, vector<128x128xf32>, vector<16x128xf32> -> vector<16x128xf32>
    %c0_3 = arith.constant 0 : index
    %c0_4 = arith.constant 0 : index
    %3 = vector.load %arg3[%c0_3, %c0_4] : memref<16x128xf32, #tpu.memory_space<vmem>>, vector<16x128xf32>
    %4 = arith.addf %2, %3 : vector<16x128xf32>
    %5 = math.tanh %4 : vector<16x128xf32>
    %c0_5 = arith.constant 0 : index
    %c0_6 = arith.constant 0 : index
    %6 = vector.load %arg5[%c0_5, %c0_6] : memref<16x128xf32, #tpu.memory_space<vmem>>, vector<16x128xf32>
    tpu.vector_store %arg5[%c0_5, %c0_6], %5 {strides = array<i32>} : memref<16x128xf32, #tpu.memory_space<vmem>>, vector<16x128xf32>,
    return
  }
  func.func @transform_0(%arg0: i32, %arg1: i32) -> (i32, i32) {
    %c0_i32 = arith.constant 0 : i32
    %c0_i32_0 = arith.constant 0 : i32
    return %arg0, %c0_i32 : i32, i32
  }
  func.func @transform_1(%arg0: i32, %arg1: i32) -> (i32, i32) {
    %c0_i32 = arith.constant 0 : i32
    return %arg0, %arg1 : i32, i32
  }
  func.func @transform_2(%arg0: i32, %arg1: i32) -> (i32, i32) {
    %c0_i32 = arith.constant 0 : i32
    %c0_i32_0 = arith.constant 0 : i32
    return %c0_i32, %arg1 : i32, i32
  }
  func.func @transform_3(%arg0: i32, %arg1: i32) -> (i32, i32) {
    %c0_i32 = arith.constant 0 : i32
    return %arg0, %arg1 : i32, i32
  }
}

</mosaic_0001>

<llo_original>
// kernel: tpu_custom_call.1
$region0: #{tpu_custom_call.1}
  #allocation0 [shape = 'u32[]', space=smem, size = 0x4, offset = 0x4, fixed_abs, tag = 'smem constant byte address 0x4 - core index']
  #allocation1 [shape = 'u32[144,128]{1,0:T(1,128)}', space=vmem, size = 0x12000, scoped, tag = 'internal scratch']
  %s0 = inlined_call_operand.hbm [shape: f32[16,128], index: 0, kind: input, shape index: {}]
  %s1 = inlined_call_operand.hbm [shape: f32[16,128], index: 1, kind: input, shape index: {}]
  %s2 = inlined_call_operand.hbm [shape: f32[128,128], index: 2, kind: input, shape index: {}]
  %s3 = inlined_call_operand.hbm [shape: f32[16,128], index: 3, kind: output, shape index: {}]
  %s4 = sld [smem:[#allocation0]]
  $region34: #{tpu_custom_call.1} parent=0
    _
  %s6 = ssub.s32 1, %s4
  %s7 = scalar_select 0, %s6, %s4
  $region1: #{tpu_custom_call.1} parent=0
    #allocation2 [shape = 'u8[8192]{0}', space=vmem, size = 0x2000, scoped, tag = 'input window, operand 0, single buffered']
    #allocation3 [shape = 's32[1]{0}', space=sflag, size = 0x4, scoped, tag = 'scoped memory for tpu_custom_call.1']
    #allocation4 [shape = 's32[1]{0}', space=sflag, size = 0x4, scoped, tag = 'scoped memory for tpu_custom_call.1']
    #allocation5 [shape = 'u8[8192]{0}', space=vmem, size = 0x2000, scoped, tag = 'input window, operand 1, single buffered']
    #allocation6 [shape = 's32[1]{0}', space=sflag, size = 0x4, scoped, tag = 'scoped memory for tpu_custom_call.1']
    #allocation7 [shape = 'u8[65536]{0}', space=vmem, size = 0x10000, scoped, tag = 'input window, operand 2, single buffered']
    #allocation8 [shape = 'u8[8192]{0}', space=vmem, size = 0x2000, scoped, tag = 'output window, operand 0, single buffered']
    %8 = vsyncpa [#allocation3], 0
    %9 = vsyncpa [#allocation6], 0
    %10 = vsyncpa [#allocation4], 0
    // Predicated region
    $region2: #{tpu_custom_call.1} parent=1 // pred_check
      _
    $region3: #{tpu_custom_call.1} parent=1 // pred_check_branch
      %12 = sbr.rel (0) target = $region5
    $region4: #{tpu_custom_call.1} parent=1 // pred_region
      %s14 = ssub.s32 256, 256
      %15 = vsyncadd [#allocation3], %s14
      %s16 = sshll.u32 [#allocation2], 4
      %s17 = int_to_ptr.vmem [resolvable:$true] %s16
      %22 = dma.hbm_to_vmem [thread:$0]  %s0, 256, %s17, [#allocation3], 128, 128, 8
    $region5: #{tpu_custom_call.1} parent=1 // pred_fallthru
      _
    // Predicated region
    $region6: #{tpu_custom_call.1} parent=1 // pred_check
      _
    $region7: #{tpu_custom_call.1} parent=1 // pred_check_branch
      %24 = sbr.rel (0) target = $region9
    $region8: #{tpu_custom_call.1} parent=1 // pred_region
      %s26 = ssub.s32 256, 256
      %27 = vsyncadd [#allocation6], %s26
      %s28 = sshll.u32 [#allocation5], 4
      %s29 = int_to_ptr.vmem [resolvable:$true] %s28
      %34 = dma.hbm_to_vmem [thread:$0]  %s1, 256, %s29, [#allocation6], 128, 128, 8
    $region9: #{tpu_custom_call.1} parent=1 // pred_fallthru
      _
    // Predicated region
    $region10: #{tpu_custom_call.1} parent=1 // pred_check
      _
    $region11: #{tpu_custom_call.1} parent=1 // pred_check_branch
      %36 = sbr.rel (0) target = $region13
    $region12: #{tpu_custom_call.1} parent=1 // pred_region
      %s38 = ssub.s32 2048, 2048
      %39 = vsyncadd [#allocation6], %s38
      %s40 = sshll.u32 [#allocation7], 4
      %s41 = int_to_ptr.vmem [resolvable:$true] %s40
      %46 = dma.hbm_to_vmem [thread:$0]  %s2, 2048, %s41, [#allocation6], 128, 128, 8
    $region13: #{tpu_custom_call.1} parent=1 // pred_fallthru
      _
    // Predicated region
    $region14: #{tpu_custom_call.1} parent=1 // pred_check
      _
    $region15: #{tpu_custom_call.1} parent=1 // pred_check_branch
      %48 = sbr.rel (0) target = $region17
    $region16: #{tpu_custom_call.1} parent=1 // pred_region
      %49 = dma.done [#allocation3], 256
    $region17: #{tpu_custom_call.1} parent=1 // pred_fallthru
      _
    // Predicated region
    $region18: #{tpu_custom_call.1} parent=1 // pred_check
      _
    $region19: #{tpu_custom_call.1} parent=1 // pred_check_branch
      %51 = sbr.rel (0) target = $region21
    $region20: #{tpu_custom_call.1} parent=1 // pred_region
      %52 = dma.done [#allocation6], 256
    $region21: #{tpu_custom_call.1} parent=1 // pred_fallthru
      _
    // Predicated region
    $region22: #{tpu_custom_call.1} parent=1 // pred_check
      _
    $region23: #{tpu_custom_call.1} parent=1 // pred_check_branch
      %54 = sbr.rel (0) target = $region25
    $region24: #{tpu_custom_call.1} parent=1 // pred_region
      %55 = dma.done [#allocation6], 2048
    $region25: #{tpu_custom_call.1} parent=1 // pred_fallthru
      _
    %v56 = vld [vmem:[#allocation2] sm:$0xff]
    %v57 = vld [vmem:[#allocation2 + $0x8] sm:$0xff]
    %v58 = vld [vmem:[#allocation7] sm:$0xff]
    %v59 = vld [vmem:[#allocation7 + $0x8] sm:$0xff]
    %v60 = vld [vmem:[#allocation7 + $0x10] sm:$0xff]
    %v61 = vld [vmem:[#allocation7 + $0x18] sm:$0xff]
    %v62 = vld [vmem:[#allocation7 + $0x20] sm:$0xff]
    %v63 = vld [vmem:[#allocation7 + $0x28] sm:$0xff]
    %v64 = vld [vmem:[#allocation7 + $0x30] sm:$0xff]
    %v65 = vld [vmem:[#allocation7 + $0x38] sm:$0xff]
    %v66 = vld [vmem:[#allocation7 + $0x40] sm:$0xff]
    %v67 = vld [vmem:[#allocation7 + $0x48] sm:$0xff]
    %v68 = vld [vmem:[#allocation7 + $0x50] sm:$0xff]
    %v69 = vld [vmem:[#allocation7 + $0x58] sm:$0xff]
    %v70 = vld [vmem:[#allocation7 + $0x60] sm:$0xff]
    %v71 = vld [vmem:[#allocation7 + $0x68] sm:$0xff]
    %v72 = vld [vmem:[#allocation7 + $0x70] sm:$0xff]
    %v73 = vld [vmem:[#allocation7 + $0x78] sm:$0xff]
    %v74 = vld [vmem:[#allocation5] sm:$0xff]
    %v75 = vld [vmem:[#allocation5 + $0x8] sm:$0xff]
    %76 = vmatprep.subr.mxu0 0.0
    %77 = vmatpush1.msra.mxu0 %v58
    %78 = vmatprep.subr.mxu0 0.0
    %79 = vmatpush1.msra.mxu0 %v59
    %80 = vmatprep.subr.mxu0 0.0
    %81 = vmatpush1.msra.mxu0 %v60
    %82 = vmatprep.subr.mxu0 0.0
    %83 = vmatpush1.msra.mxu0 %v61
    %84 = vmatprep.subr.mxu0 0.0
    %85 = vmatpush1.msra.mxu0 %v62
    %86 = vmatprep.subr.mxu0 0.0
    %87 = vmatpush1.msra.mxu0 %v63
    %88 = vmatprep.subr.mxu0 0.0
    %89 = vmatpush1.msra.mxu0 %v64
    %90 = vmatprep.subr.mxu0 0.0
    %91 = vmatpush1.msra.mxu0 %v65
    %92 = vmatprep.subr.mxu0 0.0
    %93 = vmatpush1.msra.mxu0 %v66
    %94 = vmatprep.subr.mxu0 0.0
    %95 = vmatpush1.msra.mxu0 %v67
    %96 = vmatprep.subr.mxu0 0.0
    %97 = vmatpush1.msra.mxu0 %v68
    %98 = vmatprep.subr.mxu0 0.0
    %99 = vmatpush1.msra.mxu0 %v69
    %100 = vmatprep.subr.mxu0 0.0
    %101 = vmatpush1.msra.mxu0 %v70
    %102 = vmatprep.subr.mxu0 0.0
    %103 = vmatpush1.msra.mxu0 %v71
    %104 = vmatprep.subr.mxu0 0.0
    %105 = vmatpush1.msra.mxu0 %v72
    %106 = vmatprep.subr.mxu0 0.0
    %107 = vmatpush1.msra.mxu0 %v73
    %108 = vmatprep.subr.mxu0 0.0
    %109 = vmatpush1.msra.mxu0 0.0
    %110 = vmatprep.subr.mxu0 0.0
    %111 = vmatpush1.msra.mxu0 0.0
    %112 = vmatprep.subr.mxu0 0.0
    %113 = vmatpush1.msra.mxu0 0.0
    %114 = vmatprep.subr.mxu0 0.0
    %115 = vmatpush1.msra.mxu0 0.0
    %116 = vmatprep.subr.mxu0 0.0
    %117 = vmatpush1.msra.mxu0 0.0
    %118 = vmatprep.subr.mxu0 0.0
    %119 = vmatpush1.msra.mxu0 0.0
    %120 = vmatprep.subr.mxu0 0.0
    %121 = vmatpush1.msra.mxu0 0.0
    %122 = vmatprep.subr.mxu0 0.0
    %123 = vmatpush1.msra.mxu0 0.0
    %124 = vmatprep.subr.mxu0 0.0
    %125 = vmatpush1.msra.mxu0 0.0
    %126 = vmatprep.subr.mxu0 0.0
    %127 = vmatpush1.msra.mxu0 0.0
    %128 = vmatprep.subr.mxu0 0.0
    %129 = vmatpush1.msra.mxu0 0.0
    %130 = vmatprep.subr.mxu0 0.0
    %131 = vmatpush1.msra.mxu0 0.0
    %132 = vmatprep.subr.mxu0 0.0
    %133 = vmatpush1.msra.mxu0 0.0
    %134 = vmatprep.subr.mxu0 0.0
    %135 = vmatpush1.msra.mxu0 0.0
    %136 = vmatprep.subr.mxu0 0.0
    %137 = vmatpush1.msra.mxu0 0.0
    %138 = vmatprep.subr.mxu0 0.0
    %139 = vmatpush1.msra.mxu0 0.0
    %140 = vmatprep.mubr.f32.mxu0 0.0
    %141 = vmatmul.mubr.f32.gmra.mrb[0].mxu0 %v56
    %v142 = vpop.f32.mrb[0].mxu0
    %v143 = vadd.f32 %v74, %v142
    %v144 = vpop.f32.mrb[0].mxu0
    %145 = vmatprep.mubr.f32.mxu0 0.0
    %146 = vmatmul.mubr.f32.gmra.mrb[0].mxu0 %v57
    %v147 = vpop.f32.mrb[0].mxu0
    %v148 = vadd.f32 %v75, %v147
    %v149 = vpop.f32.mrb[0].mxu0
    %150 = vdwg.mxu0
    %v151 = vtanh.pop %v143
    %v152 = vtanh.pop %v148
    %153 = vst [vmem:[#allocation8] sm:$0xff] %v151
    %154 = vst [vmem:[#allocation8 + $0x8] sm:$0xff] %v152
    // Predicated region
    $region26: #{tpu_custom_call.1} parent=1 // pred_check
      _
    $region27: #{tpu_custom_call.1} parent=1 // pred_check_branch
      %156 = sbr.rel (0) target = $region29
    $region28: #{tpu_custom_call.1} parent=1 // pred_region
      %s158 = ssub.s32 256, 256
      %159 = vsyncadd [#allocation4], %s158
      %s160 = sshll.u32 [#allocation8], 4
      %s161 = int_to_ptr.vmem [resolvable:$true] %s160
      %166 = dma.vmem_to_hbm [thread:$0]  %s161, 256, %s3, [#allocation4], 128, 128, 8
    $region29: #{tpu_custom_call.1} parent=1 // pred_fallthru
      _
    // Predicated region
    $region30: #{tpu_custom_call.1} parent=1 // pred_check
      _
    $region31: #{tpu_custom_call.1} parent=1 // pred_check_branch
      %168 = sbr.rel (0) target = $region33
    $region32: #{tpu_custom_call.1} parent=1 // pred_region
      %169 = dma.done [#allocation4], 256
    $region33: #{tpu_custom_call.1} parent=1 // pred_fallthru
      _
    %170 = vsyncpa [#allocation3], 1
    %171 = vsyncpa [#allocation6], 1
    %172 = vsyncpa [#allocation4], 1

</llo_original>
